<compile_context>
chip_gen: v7x
topology: tpu7x:2x2x1
jax: 0.10.0
libtpu: 0.0.40
codegen_flags: <defaults>
</compile_context>

<pallas_src>
import jax
import jax.numpy as jnp
from jax.experimental import pallas as pl
from jax.experimental.pallas import tpu as pltpu


# --------------------------------------------------------------------------
# Fused Pallas kernel: fc1 -> relu -> fc2 (+bias) -> * (1/T) -> softmax
# --------------------------------------------------------------------------
def attention2d_kernel(inv_t_ref, lang_ref, w1_ref, w2_ref, b2_ref, out_ref):
    # inv_t: (1, 1) f32 in SMEM
    # lang : (TB, D)   w1: (D, Hd)   w2: (Hd, K)   b2: (1, K)   out: (TB, K)
    h = jnp.maximum(
        jnp.dot(lang_ref[...], w1_ref[...], preferred_element_type=jnp.float32),
        0.0,
    )
    logits = (
        jnp.dot(h, w2_ref[...], preferred_element_type=jnp.float32) + b2_ref[...]
    )
    logits = logits * inv_t_ref[0, 0]          # x / temperature
    m = jnp.max(logits, axis=1, keepdims=True)
    e = jnp.exp(logits - m)
    s = jnp.sum(e, axis=1, keepdims=True)
    # Divide on the EUP (reciprocal) instead of the VPU.
    out_ref[...] = e * pl.reciprocal(s, approx=True)


def _round_up(x, m):
    return ((x + m - 1) // m) * m


def _padded_f32_bytes(rows, cols):
    """Bytes of a f32 block once laid out in (8, 128)-tiled VMEM."""
    return _round_up(max(rows, 1), 8) * _round_up(max(cols, 1), 128) * 4


# --------------------------------------------------------------------------
# Wrapper
# --------------------------------------------------------------------------
def attention2d_forward(lang, params, temperature, *, row_tile=2048):
    """lang: (B, D) f32.  params: w1 (D, Hd), w2 (Hd, K), b2 (1, K)."""
    B, D = lang.shape
    Hd = params["w1"].shape[1]
    K = params["w2"].shape[1]

    # ---- batch tile selection ------------------------------------------
    # Tiny batch: one block (kernel is launch-overhead bound; block dims that
    # equal the full array dims satisfy the (8,128) rule).
    if B <= 8:
        tb = B
    else:
        # >= 2 grid blocks so the "parallel" axis can use both v7x TensorCores;
        # cap at row_tile (1024-4096 sweet spot) for HBM-roofline efficiency.
        tb = min(row_tile, _round_up(pl.cdiv(B, 2), 8))
    grid = (pl.cdiv(B, tb),)

    # ---- VMEM budget (lane-padded, double-buffered) ----------------------
    block_bytes = 2 * (_padded_f32_bytes(tb, D) + _padded_f32_bytes(tb, K))
    weight_bytes = 2 * (
        _padded_f32_bytes(D, Hd) + _padded_f32_bytes(Hd, K) + _padded_f32_bytes(1, K)
    )
    vmem_limit = max(2 * (block_bytes + weight_bytes), 16 << 20)  # >= default
    vmem_limit = min(vmem_limit, 48 << 20)  # stay within v7x's 64 MiB physical

    # Scalar 1/T lives in SMEM -> no recompile when temperature anneals, and
    # the in-kernel divide becomes a scalar multiply.
    inv_t = jnp.reshape(jnp.float32(1.0) / jnp.float32(temperature), (1, 1))

    # Note: a partial last block runs softmax on padded rows internally; the
    # output BlockSpec is write-once per block, so Pallas clips those rows on
    # writeback and the visible result is unaffected.
    return pl.pallas_call(
        attention2d_kernel,
        out_shape=jax.ShapeDtypeStruct((B, K), jnp.float32),
        grid=grid,
        in_specs=[
            pl.BlockSpec(memory_space=pltpu.MemorySpace.SMEM),   # 1/temperature
            pl.BlockSpec((tb, D), lambda i: (i, 0)),             # lang rows
            pl.BlockSpec((D, Hd), lambda i: (0, 0)),             # w1 (resident)
            pl.BlockSpec((Hd, K), lambda i: (0, 0)),             # w2 (resident)
            pl.BlockSpec((1, K), lambda i: (0, 0)),              # b2 (resident)
        ],
        out_specs=pl.BlockSpec((tb, K), lambda i: (i, 0)),
        compiler_params=pltpu.CompilerParams(
            dimension_semantics=("parallel",),
            vmem_limit_bytes=int(vmem_limit),
        ),
    )(inv_t, lang, params["w1"], params["w2"], params["b2"])


# --------------------------------------------------------------------------
# Pure-JAX reference (for correctness check)
# --------------------------------------------------------------------------
def reference_forward(lang, params, temperature):
    h = jnp.maximum(
        jnp.dot(lang, params["w1"], precision=jax.lax.Precision.HIGHEST), 0.0
    )
    logits = (
        jnp.dot(h, params["w2"], precision=jax.lax.Precision.HIGHEST)
        + params["b2"]
    )
    return jax.nn.softmax(logits / temperature, axis=1)


# --------------------------------------------------------------------------
# main
# --------------------------------------------------------------------------
if __name__ == "__main__":
    # Module hyper-parameters (consistent with Attention2d.__init__).
    B, lang_dim, reduction_ratio, K, temperature = 2, 32, 4, 4, 31
    assert temperature % 3 == 1
    hidden = lang_dim // reduction_ratio if lang_dim != 3 else K

    key = jax.random.PRNGKey(0)
    k_l, k_w1, k_w2 = jax.random.split(key, 3)

    lang = jax.random.normal(k_l, (B, lang_dim), dtype=jnp.float32)

    # Deterministic synthetic init matching _initialize_weights():
    #   kaiming_normal_(mode='fan_out', relu) -> std = sqrt(2 / fan_out);
    #   fc2 bias zero-initialized.  Weights stored pre-transposed (in, out).
    w1 = jax.random.normal(k_w1, (lang_dim, hidden), jnp.float32) * jnp.sqrt(
        2.0 / hidden
    )
    w2 = jax.random.normal(k_w2, (hidden, K), jnp.float32) * jnp.sqrt(2.0 / K)
    b2 = jnp.zeros((1, K), jnp.float32)
    params = {"w1": w1, "w2": w2, "b2": b2}

    out = attention2d_forward(lang, params, temperature)
    out = jax.block_until_ready(out)

    ref = reference_forward(lang, params, temperature)
    ref = jax.block_until_ready(ref)

    assert out.shape == (B, K), out.shape
    assert jnp.allclose(out, ref, rtol=5e-3, atol=5e-4), float(
        jnp.max(jnp.abs(out - ref))
    )
    print("KERNEL_OK")
</pallas_src>

<mosaic_0001>
module attributes {stable_mosaic.version = 11 : i64} {
  func.func @attention2d_kernel(%arg0: i32, %arg1: memref<1x1xf32, #tpu.memory_space<smem>>, %arg2: memref<2x32xf32, #tpu.memory_space<vmem>>, %arg3: memref<32x8xf32, #tpu.memory_space<vmem>>, %arg4: memref<8x4xf32, #tpu.memory_space<vmem>>, %arg5: memref<1x4xf32, #tpu.memory_space<vmem>>, %arg6: memref<2x4xf32, #tpu.memory_space<vmem>>) attributes {dimension_semantics = [#tpu.dimension_semantics<parallel>], iteration_bounds = array<i64: 1>, scalar_prefetch = 0 : i64, scratch_operands = 0 : i64, tpu.core_type = #tpu.core_type<tc>, window_params = [{transform_indices = @transform_0, window_bounds = array<i64: 1, 1>}, {transform_indices = @transform_1, window_bounds = array<i64: 2, 32>}, {pipeline_mode = #tpu.pipeline_mode<synchronous>, transform_indices = @transform_2, window_bounds = array<i64: 32, 8>}, {pipeline_mode = #tpu.pipeline_mode<synchronous>, transform_indices = @transform_3, window_bounds = array<i64: 8, 4>}, {pipeline_mode = #tpu.pipeline_mode<synchronous>, transform_indices = @transform_4, window_bounds = array<i64: 1, 4>}, {transform_indices = @transform_5, window_bounds = array<i64: 2, 4>}]} {
    %c0 = arith.constant 0 : index
    %c0_0 = arith.constant 0 : index
    %0 = vector.load %arg2[%c0, %c0_0] : memref<2x32xf32, #tpu.memory_space<vmem>>, vector<2x32xf32>
    %c0_1 = arith.constant 0 : index
    %c0_2 = arith.constant 0 : index
    %1 = vector.load %arg3[%c0_1, %c0_2] : memref<32x8xf32, #tpu.memory_space<vmem>>, vector<32x8xf32>
    %cst = arith.constant dense<0.000000e+00> : vector<2x8xf32>
    %2 = tpu.matmul %0, %1, %cst {dimension_numbers = #tpu.dot_dimension_numbers<[1], [0], [0], [1], [0, 0, 1, 1], [], []>} : vector<2x32xf32>, vector<32x8xf32>, vector<2x8xf32> -> vector<2x8xf32>
    %cst_3 = arith.constant 0.000000e+00 : f32
    %3 = vector.broadcast %cst_3 : f32 to vector<2x8xf32>
    %4 = arith.maximumf %2, %3 : vector<2x8xf32>
    %c0_4 = arith.constant 0 : index
    %c0_5 = arith.constant 0 : index
    %5 = vector.load %arg4[%c0_4, %c0_5] : memref<8x4xf32, #tpu.memory_space<vmem>>, vector<8x4xf32>
    %cst_6 = arith.constant dense<0.000000e+00> : vector<2x4xf32>
    %6 = tpu.matmul %4, %5, %cst_6 {dimension_numbers = #tpu.dot_dimension_numbers<[1], [0], [0], [1], [0, 0, 1, 1], [], []>} : vector<2x8xf32>, vector<8x4xf32>, vector<2x4xf32> -> vector<2x4xf32>
    %c0_7 = arith.constant 0 : index
    %c0_8 = arith.constant 0 : index
    %7 = vector.load %arg5[%c0_7, %c0_8] : memref<1x4xf32, #tpu.memory_space<vmem>>, vector<1x4xf32>
    %8 = vector.broadcast %7 : vector<1x4xf32> to vector<2x4xf32>
    %9 = arith.addf %6, %8 : vector<2x4xf32>
    %c0_9 = arith.constant 0 : index
    %c0_10 = arith.constant 0 : index
    %10 = memref.load %arg1[%c0_9, %c0_10] : memref<1x1xf32, #tpu.memory_space<smem>>
    %11 = vector.broadcast %10 : f32 to vector<2x4xf32>
    %12 = arith.mulf %9, %11 : vector<2x4xf32>
    %cst_11 = arith.constant dense<0xFF800000> : vector<2xf32>
    %13 = vector.multi_reduction <maximumf>, %12, %cst_11 [1] : vector<2x4xf32> to vector<2xf32>
    %14 = vector.shape_cast %13 : vector<2xf32> to vector<2x1xf32>
    %15 = vector.broadcast %14 : vector<2x1xf32> to vector<2x4xf32>
    %16 = arith.subf %12, %15 : vector<2x4xf32>
    %17 = math.exp %16 : vector<2x4xf32>
    %cst_12 = arith.constant dense<0.000000e+00> : vector<2xf32>
    %18 = vector.multi_reduction <add>, %17, %cst_12 [1] : vector<2x4xf32> to vector<2xf32>
    %19 = vector.shape_cast %18 : vector<2xf32> to vector<2x1xf32>
    %20 = tpu.reciprocal %19 {approx = true} : vector<2x1xf32> -> vector<2x1xf32>
    %21 = vector.broadcast %20 : vector<2x1xf32> to vector<2x4xf32>
    %22 = arith.mulf %17, %21 : vector<2x4xf32>
    %c0_13 = arith.constant 0 : index
    %c0_14 = arith.constant 0 : index
    %23 = vector.load %arg6[%c0_13, %c0_14] : memref<2x4xf32, #tpu.memory_space<vmem>>, vector<2x4xf32>
    tpu.vector_store %arg6[%c0_13, %c0_14], %22 {strides = array<i32>} : memref<2x4xf32, #tpu.memory_space<vmem>>, vector<2x4xf32>,
    return
  }
  func.func @transform_0(%arg0: i32) -> (i32, i32) {
    %c0_i32 = arith.constant 0 : i32
    %c0_i32_0 = arith.constant 0 : i32
    %c0_i32_1 = arith.constant 0 : i32
    return %c0_i32, %c0_i32_0 : i32, i32
  }
  func.func @transform_1(%arg0: i32) -> (i32, i32) {
    %c0_i32 = arith.constant 0 : i32
    %c0_i32_0 = arith.constant 0 : i32
    return %arg0, %c0_i32 : i32, i32
  }
  func.func @transform_2(%arg0: i32) -> (i32, i32) {
    %c0_i32 = arith.constant 0 : i32
    %c0_i32_0 = arith.constant 0 : i32
    %c0_i32_1 = arith.constant 0 : i32
    return %c0_i32, %c0_i32_0 : i32, i32
  }
  func.func @transform_3(%arg0: i32) -> (i32, i32) {
    %c0_i32 = arith.constant 0 : i32
    %c0_i32_0 = arith.constant 0 : i32
    %c0_i32_1 = arith.constant 0 : i32
    return %c0_i32, %c0_i32_0 : i32, i32
  }
  func.func @transform_4(%arg0: i32) -> (i32, i32) {
    %c0_i32 = arith.constant 0 : i32
    %c0_i32_0 = arith.constant 0 : i32
    %c0_i32_1 = arith.constant 0 : i32
    return %c0_i32, %c0_i32_0 : i32, i32
  }
  func.func @transform_5(%arg0: i32) -> (i32, i32) {
    %c0_i32 = arith.constant 0 : i32
    %c0_i32_0 = arith.constant 0 : i32
    return %arg0, %c0_i32 : i32, i32
  }
}

</mosaic_0001>

<llo_original>
// kernel: tpu_custom_call.1
$region0: #{tpu_custom_call.1}
  #allocation0 [shape = 'u32[]', space=smem, size = 0x4, offset = 0x4, fixed_abs, tag = 'smem constant byte address 0x4 - core index']
  #allocation1 [shape = 'u32[144,128]{1,0:T(1,128)}', space=vmem, size = 0x12000, scoped, tag = 'internal scratch']
  #allocation2 [shape = 'f32[1,1]{1,0:T(1,128)S(6)}', space=smem, size = 0x200, scoped, tag = 'scoped memory for tpu_custom_call.1']
  %s0 = inlined_call_operand.<no memory space> [shape: f32[1,1], index: 0, kind: input, shape index: {}]
  %s1 = inlined_call_operand.vmem [shape: f32[2,32], index: 1, kind: input, shape index: {}]
  %s2 = inlined_call_operand.vmem [shape: f32[32,8], index: 2, kind: input, shape index: {}]
  %s3 = inlined_call_operand.vmem [shape: f32[8,4], index: 3, kind: input, shape index: {}]
  %s4 = inlined_call_operand.vmem [shape: f32[1,4], index: 4, kind: input, shape index: {}]
  %s5 = inlined_call_operand.hbm [shape: f32[2,4], index: 5, kind: output, shape index: {}]
  %s6 = sld [smem:[#allocation0]]
  $region30: #{tpu_custom_call.1} parent=0
    _
  %s8 = ssub.s32 1, %s6
  %s9 = scalar_select 0, %s8, %s6
  %10 = sst [smem:[#allocation2]] %s0
  $region1: #{tpu_custom_call.1} parent=0
    #allocation3 [shape = 'u8[1024]{0}', space=vmem, size = 0x400, scoped, tag = 'output window, operand 0, single buffered']
    #allocation4 [shape = 's32[1]{0}', space=sflag, size = 0x4, scoped, tag = 'scoped memory for tpu_custom_call.1']
    %11 = vsyncpa [#allocation4], 0
    // Predicated region
    $region2: #{tpu_custom_call.1} parent=1 // pred_check
      _
    $region3: #{tpu_custom_call.1} parent=1 // pred_check_branch
      %13 = sbr.rel (0) target = $region5
    $region4: #{tpu_custom_call.1} parent=1 // pred_region
      _
    $region5: #{tpu_custom_call.1} parent=1 // pred_fallthru
      _
    // Predicated region
    $region6: #{tpu_custom_call.1} parent=1 // pred_check
      _
    $region7: #{tpu_custom_call.1} parent=1 // pred_check_branch
      %15 = sbr.rel (0) target = $region9
    $region8: #{tpu_custom_call.1} parent=1 // pred_region
      _
    $region9: #{tpu_custom_call.1} parent=1 // pred_fallthru
      _
    // Predicated region
    $region10: #{tpu_custom_call.1} parent=1 // pred_check
      _
    $region11: #{tpu_custom_call.1} parent=1 // pred_check_branch
      %17 = sbr.rel (0) target = $region13
    $region12: #{tpu_custom_call.1} parent=1 // pred_region
      _
    $region13: #{tpu_custom_call.1} parent=1 // pred_fallthru
      _
    // Predicated region
    $region14: #{tpu_custom_call.1} parent=1 // pred_check
      _
    $region15: #{tpu_custom_call.1} parent=1 // pred_check_branch
      %19 = sbr.rel (0) target = $region17
    $region16: #{tpu_custom_call.1} parent=1 // pred_region
      _
    $region17: #{tpu_custom_call.1} parent=1 // pred_fallthru
      _
    // Predicated region
    $region18: #{tpu_custom_call.1} parent=1 // pred_check
      _
    $region19: #{tpu_custom_call.1} parent=1 // pred_check_branch
      %21 = sbr.rel (0) target = $region21
    $region20: #{tpu_custom_call.1} parent=1 // pred_region
      _
    $region21: #{tpu_custom_call.1} parent=1 // pred_fallthru
      _
    %v22 = vld [vmem:[%s1] sm:$0x3]
    %v23 = vld [vmem:[%s2] sm:$0xff]
    %v24 = vld [vmem:[%s2 + $0x8] sm:$0xff]
    %v25 = vld [vmem:[%s2 + $0x10] sm:$0xff]
    %v26 = vld [vmem:[%s2 + $0x18] sm:$0xff]
    %vm27 = vcmask 261120
    %v29 = vsel %vm27, %v22, 0
    %31 = vmatprep.subr.mxu0 0.0
    %32 = vmatpush1.msra.mxu0 %v23
    %33 = vmatprep.subr.mxu0 0.0
    %34 = vmatpush1.msra.mxu0 %v24
    %35 = vmatprep.subr.mxu0 0.0
    %36 = vmatpush1.msra.mxu0 %v25
    %37 = vmatprep.subr.mxu0 0.0
    %38 = vmatpush1.msra.mxu0 %v26
    %39 = vmatprep.subr.mxu0 0.0
    %40 = vmatpush1.msra.mxu0 0.0
    %41 = vmatprep.subr.mxu0 0.0
    %42 = vmatpush1.msra.mxu0 0.0
    %43 = vmatprep.subr.mxu0 0.0
    %44 = vmatpush1.msra.mxu0 0.0
    %45 = vmatprep.subr.mxu0 0.0
    %46 = vmatpush1.msra.mxu0 0.0
    %47 = vmatprep.subr.mxu0 0.0
    %48 = vmatpush1.msra.mxu0 0.0
    %49 = vmatprep.subr.mxu0 0.0
    %50 = vmatpush1.msra.mxu0 0.0
    %51 = vmatprep.subr.mxu0 0.0
    %52 = vmatpush1.msra.mxu0 0.0
    %53 = vmatprep.subr.mxu0 0.0
    %54 = vmatpush1.msra.mxu0 0.0
    %55 = vmatprep.subr.mxu0 0.0
    %56 = vmatpush1.msra.mxu0 0.0
    %57 = vmatprep.subr.mxu0 0.0
    %58 = vmatpush1.msra.mxu0 0.0
    %59 = vmatprep.subr.mxu0 0.0
    %60 = vmatpush1.msra.mxu0 0.0
    %61 = vmatprep.subr.mxu0 0.0
    %62 = vmatpush1.msra.mxu0 0.0
    %63 = vmatprep.subr.mxu0 0.0
    %64 = vmatpush1.msra.mxu0 0.0
    %65 = vmatprep.subr.mxu0 0.0
    %66 = vmatpush1.msra.mxu0 0.0
    %67 = vmatprep.subr.mxu0 0.0
    %68 = vmatpush1.msra.mxu0 0.0
    %69 = vmatprep.subr.mxu0 0.0
    %70 = vmatpush1.msra.mxu0 0.0
    %71 = vmatprep.subr.mxu0 0.0
    %72 = vmatpush1.msra.mxu0 0.0
    %73 = vmatprep.subr.mxu0 0.0
    %74 = vmatpush1.msra.mxu0 0.0
    %75 = vmatprep.subr.mxu0 0.0
    %76 = vmatpush1.msra.mxu0 0.0
    %77 = vmatprep.subr.mxu0 0.0
    %78 = vmatpush1.msra.mxu0 0.0
    %79 = vmatprep.subr.mxu0 0.0
    %80 = vmatpush1.msra.mxu0 0.0
    %81 = vmatprep.subr.mxu0 0.0
    %82 = vmatpush1.msra.mxu0 0.0
    %83 = vmatprep.subr.mxu0 0.0
    %84 = vmatpush1.msra.mxu0 0.0
    %85 = vmatprep.subr.mxu0 0.0
    %86 = vmatpush1.msra.mxu0 0.0
    %87 = vmatprep.subr.mxu0 0.0
    %88 = vmatpush1.msra.mxu0 0.0
    %89 = vmatprep.subr.mxu0 0.0
    %90 = vmatpush1.msra.mxu0 0.0
    %91 = vmatprep.subr.mxu0 0.0
    %92 = vmatpush1.msra.mxu0 0.0
    %93 = vmatprep.subr.mxu0 0.0
    %94 = vmatpush1.msra.mxu0 0.0
    %95 = vmatprep.mubr.f32.mxu0 0.0
    %96 = vmatmul.mubr.f32.gmra.mrb[0].mxu0 %v29
    %v97 = vpop.f32.mrb[0].mxu0
    %v98 = vadd.f32 0.0, %v97
    %v99 = vpop.f32.mrb[0].mxu0
    %100 = vdwg.mxu0
    %v101 = vmax.f32 %v98, 0.0
    %v102 = vld [vmem:[%s3] sm:$0xff]
    %v103 = vld [vmem:[%s4] sm:$0x1]
    %v105 = vlaneseq
    %v106 = vshrl.u32 %v105, 7
    %v107 = vsub.s32 0, %v106
    %v108 = vrot.slane %v103, %v107
    %vm110 = vcmask 64512
    %v112 = vsel %vm110, %v101, 0
    %114 = vmatprep.subr.mxu0 0.0
    %115 = vmatpush1.msra.mxu0 %v102
    %116 = vmatprep.subr.mxu0 0.0
    %117 = vmatpush1.msra.mxu0 0.0
    %118 = vmatprep.subr.mxu0 0.0
    %119 = vmatpush1.msra.mxu0 0.0
    %120 = vmatprep.subr.mxu0 0.0
    %121 = vmatpush1.msra.mxu0 0.0
    %122 = vmatprep.subr.mxu0 0.0
    %123 = vmatpush1.msra.mxu0 0.0
    %124 = vmatprep.subr.mxu0 0.0
    %125 = vmatpush1.msra.mxu0 0.0
    %126 = vmatprep.subr.mxu0 0.0
    %127 = vmatpush1.msra.mxu0 0.0
    %128 = vmatprep.subr.mxu0 0.0
    %129 = vmatpush1.msra.mxu0 0.0
    %130 = vmatprep.subr.mxu0 0.0
    %131 = vmatpush1.msra.mxu0 0.0
    %132 = vmatprep.subr.mxu0 0.0
    %133 = vmatpush1.msra.mxu0 0.0
    %134 = vmatprep.subr.mxu0 0.0
    %135 = vmatpush1.msra.mxu0 0.0
    %136 = vmatprep.subr.mxu0 0.0
    %137 = vmatpush1.msra.mxu0 0.0
    %138 = vmatprep.subr.mxu0 0.0
    %139 = vmatpush1.msra.mxu0 0.0
    %140 = vmatprep.subr.mxu0 0.0
    %141 = vmatpush1.msra.mxu0 0.0
    %142 = vmatprep.subr.mxu0 0.0
    %143 = vmatpush1.msra.mxu0 0.0
    %144 = vmatprep.subr.mxu0 0.0
    %145 = vmatpush1.msra.mxu0 0.0
    %146 = vmatprep.subr.mxu0 0.0
    %147 = vmatpush1.msra.mxu0 0.0
    %148 = vmatprep.subr.mxu0 0.0
    %149 = vmatpush1.msra.mxu0 0.0
    %150 = vmatprep.subr.mxu0 0.0
    %151 = vmatpush1.msra.mxu0 0.0
    %152 = vmatprep.subr.mxu0 0.0
    %153 = vmatpush1.msra.mxu0 0.0
    %154 = vmatprep.subr.mxu0 0.0
    %155 = vmatpush1.msra.mxu0 0.0
    %156 = vmatprep.subr.mxu0 0.0
    %157 = vmatpush1.msra.mxu0 0.0
    %158 = vmatprep.subr.mxu0 0.0
    %159 = vmatpush1.msra.mxu0 0.0
    %160 = vmatprep.subr.mxu0 0.0
    %161 = vmatpush1.msra.mxu0 0.0
    %162 = vmatprep.subr.mxu0 0.0
    %163 = vmatpush1.msra.mxu0 0.0
    %164 = vmatprep.subr.mxu0 0.0
    %165 = vmatpush1.msra.mxu0 0.0
    %166 = vmatprep.subr.mxu0 0.0
    %167 = vmatpush1.msra.mxu0 0.0
    %168 = vmatprep.subr.mxu0 0.0
    %169 = vmatpush1.msra.mxu0 0.0
    %170 = vmatprep.subr.mxu0 0.0
    %171 = vmatpush1.msra.mxu0 0.0
    %172 = vmatprep.subr.mxu0 0.0
    %173 = vmatpush1.msra.mxu0 0.0
    %174 = vmatprep.subr.mxu0 0.0
    %175 = vmatpush1.msra.mxu0 0.0
    %176 = vmatprep.subr.mxu0 0.0
    %177 = vmatpush1.msra.mxu0 0.0
    %178 = vmatprep.mubr.f32.mxu0 0.0
    %179 = vmatmul.mubr.f32.gmra.mrb[0].mxu0 %v112
    %v180 = vpop.f32.mrb[0].mxu0
    %v181 = vadd.f32 %v108, %v180
    %v182 = vpop.f32.mrb[0].mxu0
    %183 = vdwg.mxu0
    %s184 = sld [smem:[#allocation2]]
    %v185 = vstv %s184
    %v186 = vmul.f32 %v181, %v185
    %vm187 = vcmask 25600
    %v188 = vsel %vm187, %v186, -inf
    %189 = vmax.xlane.f32.xlu0 %v188
    %v190 = vpop.xlane.xlu0 %189
    %v191 = vsub.f32 %v186, %v190
    %v192 = vmul.f32 %v191, 1.442695
    %v193 = vpow.pop %v192
    %v194 = vsel %vm187, %v193, 0.0
    %195 = vadd.xlane.f32.xlu0 %v194
    %v196 = vpop.xlane.xlu0 %195
    %v197 = vrcp.pop %v196
    %v198 = vmul.f32 %v193, %v197
    %199 = vst.msk [vmem:[#allocation3] sm:$0x3] %vm187, %v198
    // Predicated region
    $region22: #{tpu_custom_call.1} parent=1 // pred_check
      _
    $region23: #{tpu_custom_call.1} parent=1 // pred_check_branch
      %201 = sbr.rel (0) target = $region25
    $region24: #{tpu_custom_call.1} parent=1 // pred_region
      %s203 = ssub.s32 32, 32
      %204 = vsyncadd [#allocation4], %s203
      %s206 = sshll.u32 [#allocation3], 4
      %s207 = int_to_ptr.vmem [resolvable:$true] %s206
      %209 = dma.vmem_to_hbm [thread:$0]  %s207, 32, %s5, [#allocation4]
    $region25: #{tpu_custom_call.1} parent=1 // pred_fallthru
      _
    // Predicated region
    $region26: #{tpu_custom_call.1} parent=1 // pred_check
      _
    $region27: #{tpu_custom_call.1} parent=1 // pred_check_branch
      %211 = sbr.rel (0) target = $region29
    $region28: #{tpu_custom_call.1} parent=1 // pred_region
      %212 = dma.done [#allocation4], 32
    $region29: #{tpu_custom_call.1} parent=1 // pred_fallthru
      _
    %213 = vsyncpa [#allocation4], 1

</llo_original>
